<compile_context>
chip_gen: v6e
topology: v6e:2x2x1
jax: 0.10.0
libtpu: 0.0.40
codegen_flags: <defaults>
</compile_context>

<pallas_src>
import functools

import numpy as np

import jax
import jax.numpy as jnp
from jax import lax
from jax.experimental import pallas as pl
from jax.experimental.pallas import tpu as pltpu

HI = jax.lax.Precision.HIGHEST


# ---------------------------------------------------------------------------
# In-kernel building blocks (operate on VMEM-resident values / refs)
# ---------------------------------------------------------------------------

def _add_layer_norm(x, res, gamma, beta, eps=1e-5):
    y = x + res
    mu = jnp.mean(y, axis=-1, keepdims=True)
    var = jnp.mean(jnp.square(y - mu), axis=-1, keepdims=True)
    return (y - mu) * lax.rsqrt(var + eps) * gamma + beta


def _mha_compute(xq, xkv, add_mask, w_ref, b_ref, n_head):
    """Multi-head attention, all heads in one pass.

    xq, xkv : (S, D) activations (xq is xkv for self-attention).
    add_mask: (S, S) additive mask (0.0 or -1e9), precomputed host-side.
    w_ref   : (4, D, D) stacked [Wq^T, Wk^T, Wv^T, Wproj^T] (input-major).
    b_ref   : (4, 1, D) stacked [bq, bk, bv, bproj].
    """
    seq, d = xq.shape
    hd = d // n_head
    # Full-width projections: one (S,D)x(D,D) MXU op each.
    q = jnp.dot(xq, w_ref[0], preferred_element_type=jnp.float32) + b_ref[0]
    k = jnp.dot(xkv, w_ref[1], preferred_element_type=jnp.float32) + b_ref[1]
    v = jnp.dot(xkv, w_ref[2], preferred_element_type=jnp.float32) + b_ref[2]
    wp = w_ref[3]
    scale = 1.0 / (jnp.sqrt(jnp.float32(hd)) + 1e-8)

    acc = None
    for h in range(n_head):                      # static unroll; n_head is small
        lo, hi = h * hd, (h + 1) * hd
        qh, kh, vh = q[:, lo:hi], k[:, lo:hi], v[:, lo:hi]
        # q @ k^T without materializing a transpose (contract feature axes).
        s = lax.dot_general(qh, kh, (((1,), (1,)), ((), ())),
                            preferred_element_type=jnp.float32) * scale
        s = s + add_mask
        s = s - jnp.max(s, axis=-1, keepdims=True)
        p = jnp.exp(s)
        p = p * pl.reciprocal(jnp.sum(p, axis=-1, keepdims=True), approx=True)
        ctx = jnp.dot(p, vh, preferred_element_type=jnp.float32)     # (S, Hd)
        part = jnp.dot(ctx, wp[lo:hi, :], preferred_element_type=jnp.float32)
        acc = part if acc is None else acc + part                     # == concat @ Wp^T
    return acc + b_ref[3]


def _ffn_compute(x, w1, b1, w2, b2):
    h = jnp.maximum(jnp.dot(x, w1, preferred_element_type=jnp.float32) + b1, 0.0)
    return jnp.dot(h, w2, preferred_element_type=jnp.float32) + b2


# ---------------------------------------------------------------------------
# Kernels
# ---------------------------------------------------------------------------

def _pos_emb_kernel(ids_ref, emb_ref, pe_ref, out_ref):
    # ids_ref: (1, S, 1) int32; emb_ref: (V, D) resident; pe_ref: (S, D) resident
    # out_ref: (1, S, D)
    seq = ids_ref.shape[1]
    n_vocab = emb_ref.shape[0]
    vocab_iota = lax.broadcasted_iota(jnp.int32, (seq, n_vocab), 1)
    onehot = (vocab_iota == ids_ref[0]).astype(jnp.float32)          # (S, V)
    out_ref[0] = jnp.dot(onehot, emb_ref[...],
                         preferred_element_type=jnp.float32) + pe_ref[...]


def _encoder_layer_kernel(x_ref, mask_ref, w_attn_ref, b_attn_ref,
                          w1_ref, b1_ref, w2_ref, b2_ref,
                          ln_g_ref, ln_b_ref, out_ref, *, n_head):
    # Fused: self-MHA -> Add&LN -> FFN -> Add&LN, all in VMEM.
    x = x_ref[0]                                                     # (S, D)
    attn = _mha_compute(x, x, mask_ref[0], w_attn_ref, b_attn_ref, n_head)
    h1 = _add_layer_norm(attn, x, ln_g_ref[0], ln_b_ref[0])
    f = _ffn_compute(h1, w1_ref[...], b1_ref[...], w2_ref[...], b2_ref[...])
    out_ref[0] = _add_layer_norm(f, h1, ln_g_ref[1], ln_b_ref[1])


def _decoder_layer_kernel(x1_ref, x2_ref, la_ref, pad_ref,
                          w_a1_ref, b_a1_ref, w_a2_ref, b_a2_ref,
                          w1_ref, b1_ref, w2_ref, b2_ref,
                          ln_g_ref, ln_b_ref, out_ref, *, n_head):
    # Fused: self-MHA -> Add&LN -> cross-MHA -> Add&LN -> FFN -> Add&LN.
    x1 = x1_ref[0]                                                   # decoder act
    x2 = x2_ref[0]                                                   # encoder out
    a1 = _mha_compute(x1, x1, la_ref[0], w_a1_ref, b_a1_ref, n_head)
    o1 = _add_layer_norm(a1, x1, ln_g_ref[0], ln_b_ref[0])
    a2 = _mha_compute(o1, x2, pad_ref[0], w_a2_ref, b_a2_ref, n_head)
    o2 = _add_layer_norm(a2, o1, ln_g_ref[1], ln_b_ref[1])
    f = _ffn_compute(o2, w1_ref[...], b1_ref[...], w2_ref[...], b2_ref[...])
    out_ref[0] = _add_layer_norm(f, o2, ln_g_ref[2], ln_b_ref[2])


def _out_linear_kernel(x_ref, w_ref, b_ref, o_ref):
    o_ref[0] = jnp.dot(x_ref[0], w_ref[...],
                       preferred_element_type=jnp.float32) + b_ref[...]


# ---------------------------------------------------------------------------
# Wrappers (pallas_call glue)
# ---------------------------------------------------------------------------

def _resident(arr):
    """Full-array block with a grid-invariant index_map: DMA'd once, VMEM-resident."""
    nd = arr.ndim
    return pl.BlockSpec(arr.shape, lambda i, _nd=nd: (0,) * _nd)


def position_embedding(ids, emb_table, pe):
    """ids: (B, S) int; emb_table: (V, D); pe: (S, D)  ->  (B, S, D) f32."""
    batch, seq = ids.shape
    n_vocab, d = emb_table.shape
    assert pe.shape == (seq, d)
    assert n_vocab * d * 4 <= 8 * 1024 * 1024, "table too large for VMEM-resident path"

    ids3 = ids.astype(jnp.int32).reshape(batch, seq, 1)
    grid_spec = pltpu.PrefetchScalarGridSpec(
        num_scalar_prefetch=0,
        grid=(batch,),
        in_specs=[
            pl.BlockSpec((1, seq, 1), lambda i: (i, 0, 0)),
            _resident(emb_table),
            _resident(pe),
        ],
        out_specs=pl.BlockSpec((1, seq, d), lambda i: (i, 0, 0)),
    )
    return pl.pallas_call(
        _pos_emb_kernel,
        out_shape=jax.ShapeDtypeStruct((batch, seq, d), jnp.float32),
        grid_spec=grid_spec,
        compiler_params=pltpu.CompilerParams(dimension_semantics=("parallel",)),
    )(ids3, emb_table, pe)


def encoder_layer(x, pad_add, lp, n_head):
    b, s, d = x.shape
    kernel = functools.partial(_encoder_layer_kernel, n_head=n_head)
    grid_spec = pltpu.PrefetchScalarGridSpec(
        num_scalar_prefetch=0,
        grid=(b,),
        in_specs=[
            pl.BlockSpec((1, s, d), lambda i: (i, 0, 0)),
            pl.BlockSpec((1, s, s), lambda i: (i, 0, 0)),
            _resident(lp["w_attn"]), _resident(lp["b_attn"]),
            _resident(lp["w1"]), _resident(lp["b1"]),
            _resident(lp["w2"]), _resident(lp["b2"]),
            _resident(lp["ln_g"]), _resident(lp["ln_b"]),
        ],
        out_specs=pl.BlockSpec((1, s, d), lambda i: (i, 0, 0)),
    )
    return pl.pallas_call(
        kernel,
        out_shape=jax.ShapeDtypeStruct((b, s, d), jnp.float32),
        grid_spec=grid_spec,
        compiler_params=pltpu.CompilerParams(dimension_semantics=("parallel",)),
    )(x, pad_add, lp["w_attn"], lp["b_attn"], lp["w1"], lp["b1"],
      lp["w2"], lp["b2"], lp["ln_g"], lp["ln_b"])


def decoder_layer(x1, x2, la_add, pad_add, lp, n_head):
    b, s, d = x1.shape
    kernel = functools.partial(_decoder_layer_kernel, n_head=n_head)
    grid_spec = pltpu.PrefetchScalarGridSpec(
        num_scalar_prefetch=0,
        grid=(b,),
        in_specs=[
            pl.BlockSpec((1, s, d), lambda i: (i, 0, 0)),
            pl.BlockSpec((1, s, d), lambda i: (i, 0, 0)),
            pl.BlockSpec((1, s, s), lambda i: (i, 0, 0)),
            pl.BlockSpec((1, s, s), lambda i: (i, 0, 0)),
            _resident(lp["w_a1"]), _resident(lp["b_a1"]),
            _resident(lp["w_a2"]), _resident(lp["b_a2"]),
            _resident(lp["w1"]), _resident(lp["b1"]),
            _resident(lp["w2"]), _resident(lp["b2"]),
            _resident(lp["ln_g"]), _resident(lp["ln_b"]),
        ],
        out_specs=pl.BlockSpec((1, s, d), lambda i: (i, 0, 0)),
    )
    return pl.pallas_call(
        kernel,
        out_shape=jax.ShapeDtypeStruct((b, s, d), jnp.float32),
        grid_spec=grid_spec,
        compiler_params=pltpu.CompilerParams(dimension_semantics=("parallel",)),
    )(x1, x2, la_add, pad_add, lp["w_a1"], lp["b_a1"], lp["w_a2"], lp["b_a2"],
      lp["w1"], lp["b1"], lp["w2"], lp["b2"], lp["ln_g"], lp["ln_b"])


def output_linear(x, wout, bout):
    """x: (B, S, D); wout: (D, V) input-major; bout: (1, V) -> (B, S, V)."""
    b, s, d = x.shape
    v = wout.shape[1]
    grid_spec = pltpu.PrefetchScalarGridSpec(
        num_scalar_prefetch=0,
        grid=(b,),
        in_specs=[
            pl.BlockSpec((1, s, d), lambda i: (i, 0, 0)),
            _resident(wout),
            _resident(bout),
        ],
        out_specs=pl.BlockSpec((1, s, v), lambda i: (i, 0, 0)),
    )
    return pl.pallas_call(
        _out_linear_kernel,
        out_shape=jax.ShapeDtypeStruct((b, s, v), jnp.float32),
        grid_spec=grid_spec,
        compiler_params=pltpu.CompilerParams(dimension_semantics=("parallel",)),
    )(x, wout, bout)


# ---------------------------------------------------------------------------
# Full forward pass
# ---------------------------------------------------------------------------

def build_masks(padding_idx, batch):
    """Additive masks (0.0 / -1e9), precomputed once per forward."""
    am = batch["attention_mask"]          # (B, S) bool, True = real token
    gt = batch["gt_ids"]                  # (B, S) int
    b, s = gt.shape
    pad_add = jnp.where(am, 0.0, -1e9).astype(jnp.float32)           # (B, S)
    pad_add = jnp.broadcast_to(pad_add[:, None, :], (b, s, s))
    tri = jnp.triu(jnp.ones((s, s), jnp.int32), 1)
    la = jnp.where((gt == padding_idx)[:, None, :], 1, tri[None, :, :])
    la_add = la.astype(jnp.float32) * (-1e9)
    return pad_add, la_add


def transformer_forward(params, batch):
    """params: prepared (kernel-layout) params from prepare_params."""
    n_head = params["n_head"]
    b, s = batch["input_ids"].shape
    pad_add, la_add = build_masks(params["padding_idx"], batch)

    # Embed input and gt sequences in one pallas_call (concat along batch).
    ids_all = jnp.concatenate(
        [batch["input_ids"].astype(jnp.int32), batch["gt_ids"].astype(jnp.int32)], 0)
    emb_all = position_embedding(ids_all, params["emb_table"], params["pe"])
    x, y = emb_all[:b], emb_all[b:]

    enc = x
    for lp in params["encoder"]:
        enc = encoder_layer(enc, pad_add, lp, n_head)

    dec = y
    for lp in params["decoder"]:
        dec = decoder_layer(dec, enc, la_add, pad_add, lp, n_head)

    return output_linear(dec, params["wout"], params["bout"])


# ---------------------------------------------------------------------------
# Parameters (torch-style layouts), one-time kernel re-layout, PE table
# ---------------------------------------------------------------------------

def make_positional_encoding(max_len, model_dim):
    # Exactly mirrors the PyTorch __init__ math (exponent uses arange(model_dim)).
    pos = np.arange(max_len)[:, None]
    pe = pos / np.power(10000, 2.0 * np.arange(model_dim)[None, :] / model_dim)
    pe[:, 0::2] = np.sin(pe[:, 0::2])
    pe[:, 1::2] = np.cos(pe[:, 1::2])
    return jnp.asarray(pe, dtype=jnp.float32)


def init_linear(key, d_in, d_out):
    kw, kb = jax.random.split(key)
    bound = 1.0 / float(np.sqrt(d_in))
    w = jax.random.uniform(kw, (d_out, d_in), jnp.float32, -bound, bound)
    b = jax.random.uniform(kb, (d_out,), jnp.float32, -bound, bound)
    return w, b


def init_ln(key, d):
    kg, kb = jax.random.split(key)
    gamma = 1.0 + 0.1 * jax.random.normal(kg, (d,), jnp.float32)
    beta = 0.1 * jax.random.normal(kb, (d,), jnp.float32)
    return gamma, beta


def init_mha(key, d):
    ks = jax.random.split(key, 4)
    wq, bq = init_linear(ks[0], d, d)
    wk, bk = init_linear(ks[1], d, d)
    wv, bv = init_linear(ks[2], d, d)
    wp, bp = init_linear(ks[3], d, d)
    return dict(wq=wq, bq=bq, wk=wk, bk=bk, wv=wv, bv=bv, wp=wp, bp=bp)


def init_ffn(key, d, expand=4.0):
    hidden = int(d * expand)
    k1, k2 = jax.random.split(key)
    w1, b1 = init_linear(k1, d, hidden)
    w2, b2 = init_linear(k2, hidden, d)
    return dict(w1=w1, b1=b1, w2=w2, b2=b2)


def init_encoder_layer(key, d):
    k = jax.random.split(key, 4)
    return dict(attn=init_mha(k[0], d), ln1=init_ln(k[1], d),
                ffn=init_ffn(k[2], d), ln2=init_ln(k[3], d))


def init_decoder_layer(key, d):
    k = jax.random.split(key, 6)
    return dict(attn1=init_mha(k[0], d), attn2=init_mha(k[1], d),
                ln1=init_ln(k[2], d), ln2=init_ln(k[3], d), ln3=init_ln(k[4], d),
                ffn=init_ffn(k[5], d))


def init_transformer(key, max_len, model_dim, n_head, n_layer, n_vocab, pad_id):
    keys = jax.random.split(key, 2 * n_layer + 2)
    emb = 0.01 * jax.random.normal(keys[0], (n_vocab, model_dim), jnp.float32)
    wout, bout = init_linear(keys[1], model_dim, n_vocab)
    enc = [init_encoder_layer(keys[2 + i], model_dim) for i in range(n_layer)]
    dec = [init_decoder_layer(keys[2 + n_layer + i], model_dim)
           for i in range(n_layer)]
    return dict(emb_table=emb, pe=make_positional_encoding(max_len, model_dim),
                wout=wout, bout=bout, encoder=enc, decoder=dec,
                padding_idx=jnp.int32(pad_id), n_head=n_head)


def prepare_params(raw):
    """One-time host-side re-layout: transpose to input-major, stack per-layer
    weights so every pallas_call gets a handful of resident full blocks."""
    def prep_attn(a):
        w = jnp.stack([a["wq"].T, a["wk"].T, a["wv"].T, a["wp"].T], 0)      # (4,D,D)
        b = jnp.stack([a["bq"].reshape(1, -1), a["bk"].reshape(1, -1),
                       a["bv"].reshape(1, -1), a["bp"].reshape(1, -1)], 0)  # (4,1,D)
        return w, b

    def prep_ffn(f):
        return f["w1"].T, f["b1"].reshape(1, -1), f["w2"].T, f["b2"].reshape(1, -1)

    enc = []
    for lp in raw["encoder"]:
        w_attn, b_attn = prep_attn(lp["attn"])
        w1, b1, w2, b2 = prep_ffn(lp["ffn"])
        ln_g = jnp.stack([lp["ln1"][0].reshape(1, -1), lp["ln2"][0].reshape(1, -1)], 0)
        ln_b = jnp.stack([lp["ln1"][1].reshape(1, -1), lp["ln2"][1].reshape(1, -1)], 0)
        enc.append(dict(w_attn=w_attn, b_attn=b_attn, w1=w1, b1=b1, w2=w2, b2=b2,
                        ln_g=ln_g, ln_b=ln_b))

    dec = []
    for lp in raw["decoder"]:
        w_a1, b_a1 = prep_attn(lp["attn1"])
        w_a2, b_a2 = prep_attn(lp["attn2"])
        w1, b1, w2, b2 = prep_ffn(lp["ffn"])
        ln_g = jnp.stack([lp["ln1"][0].reshape(1, -1), lp["ln2"][0].reshape(1, -1),
                          lp["ln3"][0].reshape(1, -1)], 0)
        ln_b = jnp.stack([lp["ln1"][1].reshape(1, -1), lp["ln2"][1].reshape(1, -1),
                          lp["ln3"][1].reshape(1, -1)], 0)
        dec.append(dict(w_a1=w_a1, b_a1=b_a1, w_a2=w_a2, b_a2=b_a2,
                        w1=w1, b1=b1, w2=w2, b2=b2, ln_g=ln_g, ln_b=ln_b))

    return dict(emb_table=raw["emb_table"], pe=raw["pe"],
                wout=raw["wout"].T, bout=raw["bout"].reshape(1, -1),
                encoder=enc, decoder=dec,
                padding_idx=raw["padding_idx"], n_head=raw["n_head"])


# ---------------------------------------------------------------------------
# Pure-JAX reference (HIGHEST matmul precision) for correctness checking
# ---------------------------------------------------------------------------

def _ref_embed(ids, table, pe):
    return table[ids] + pe[None, :, :]


def _ref_ln(x, gamma, beta):
    mu = jnp.mean(x, -1, keepdims=True)
    var = jnp.mean((x - mu) ** 2, -1, keepdims=True)
    return (x - mu) * jax.lax.rsqrt(var + 1e-5) * gamma + beta


def _ref_mha(xq, xkv, add_mask, p, n_head):
    lin = lambda x, w, b_: jnp.matmul(x, w.T, precision=HI) + b_
    q, k, v = lin(xq, p["wq"], p["bq"]), lin(xkv, p["wk"], p["bk"]), lin(xkv, p["wv"], p["bv"])
    b, s, d = q.shape
    hd = d // n_head
    sp = lambda t: t.reshape(b, s, n_head, hd).transpose(0, 2, 1, 3)
    q, k, v = sp(q), sp(k), sp(v)
    score = jnp.matmul(q, k.transpose(0, 1, 3, 2), precision=HI) / (
        jnp.sqrt(jnp.float32(hd)) + 1e-8)
    score = score + add_mask[:, None, :, :]
    score = jax.nn.softmax(score, axis=-1)
    ctx = jnp.matmul(score, v, precision=HI)
    ctx = ctx.transpose(0, 2, 1, 3).reshape(b, s, d)
    return jnp.matmul(ctx, p["wp"].T, precision=HI) + p["bp"]


def _ref_ffn(x, p):
    h = jnp.maximum(jnp.matmul(x, p["w1"].T, precision=HI) + p["b1"], 0.0)
    return jnp.matmul(h, p["w2"].T, precision=HI) + p["b2"]


def reference_forward(params, batch):
    n_head = params["n_head"]
    pad_add, la_add = build_masks(params["padding_idx"], batch)
    x = _ref_embed(batch["input_ids"], params["emb_table"], params["pe"])
    y = _ref_embed(batch["gt_ids"], params["emb_table"], params["pe"])

    enc = x
    for lp in params["encoder"]:
        a = _ref_mha(enc, enc, pad_add, lp["attn"], n_head)
        h1 = _ref_ln(a + enc, *lp["ln1"])
        enc = _ref_ln(_ref_ffn(h1, lp["ffn"]) + h1, *lp["ln2"])

    dec = y
    for lp in params["decoder"]:
        a1 = _ref_mha(dec, dec, la_add, lp["attn1"], n_head)
        o1 = _ref_ln(a1 + dec, *lp["ln1"])
        a2 = _ref_mha(o1, enc, pad_add, lp["attn2"], n_head)
        o2 = _ref_ln(a2 + o1, *lp["ln2"])
        dec = _ref_ln(_ref_ffn(o2, lp["ffn"]) + o2, *lp["ln3"])

    return jnp.matmul(dec, params["wout"].T, precision=HI) + params["bout"]


# ---------------------------------------------------------------------------
# Demo / correctness check
# ---------------------------------------------------------------------------

if __name__ == "__main__":
    MAX_LEN = 8
    MODEL_DIM = 32
    N_HEAD = 4
    N_LAYER = 3
    N_VOCAB = 50
    BATCH = 2
    PAD_ID = 0

    root = jax.random.PRNGKey(0)
    k_params, k_in, k_gt = jax.random.split(root, 3)

    raw_params = init_transformer(k_params, MAX_LEN, MODEL_DIM, N_HEAD, N_LAYER,
                                  N_VOCAB, PAD_ID)
    params = prepare_params(raw_params)

    input_ids = jax.random.randint(k_in, (BATCH, MAX_LEN), 1, N_VOCAB,
                                   dtype=jnp.int32)
    gt_ids = jax.random.randint(k_gt, (BATCH, MAX_LEN), 1, N_VOCAB,
                                dtype=jnp.int32)
    # pad the tail of the second sequence
    input_ids = input_ids.at[1, 6:].set(PAD_ID)
    gt_ids = gt_ids.at[1, 5:].set(PAD_ID)
    attention_mask = input_ids != PAD_ID

    batch = dict(input_ids=input_ids, gt_ids=gt_ids,
                 attention_mask=attention_mask)

    out = transformer_forward(params, batch)
    out = jax.block_until_ready(out)

    ref = reference_forward(raw_params, batch)
    assert out.shape == (BATCH, MAX_LEN, N_VOCAB)
    assert out.dtype == jnp.float32
    np.testing.assert_allclose(np.asarray(out), np.asarray(ref),
                               rtol=2e-2, atol=2e-2)

    print("KERNEL_OK")
</pallas_src>

<mosaic_0001>
module attributes {stable_mosaic.version = 11 : i64} {
  func.func @_pos_emb_kernel(%arg0: i32, %arg1: memref<1x8x1xi32, #tpu.memory_space<vmem>>, %arg2: memref<50x32xf32, #tpu.memory_space<vmem>>, %arg3: memref<8x32xf32, #tpu.memory_space<vmem>>, %arg4: memref<1x8x32xf32, #tpu.memory_space<vmem>>) attributes {dimension_semantics = [#tpu.dimension_semantics<parallel>], iteration_bounds = array<i64: 4>, scalar_prefetch = 0 : i64, scratch_operands = 0 : i64, tpu.core_type = #tpu.core_type<tc>, window_params = [{transform_indices = @transform_0, window_bounds = array<i64: 1, 8, 1>}, {pipeline_mode = #tpu.pipeline_mode<synchronous>, transform_indices = @transform_1, window_bounds = array<i64: 50, 32>}, {pipeline_mode = #tpu.pipeline_mode<synchronous>, transform_indices = @transform_2, window_bounds = array<i64: 8, 32>}, {transform_indices = @transform_3, window_bounds = array<i64: 1, 8, 32>}]} {
    %0 = tpu.iota {dimensions = array<i32: 1>} : vector<8x50xi32>
    %c0 = arith.constant 0 : index
    %c0_0 = arith.constant 0 : index
    %c0_1 = arith.constant 0 : index
    %1 = vector.load %arg1[%c0, %c0_0, %c0_1] : memref<1x8x1xi32, #tpu.memory_space<vmem>>, vector<1x8x1xi32>
    %2 = vector.shape_cast %1 : vector<1x8x1xi32> to vector<8x1xi32>
    %3 = vector.broadcast %2 : vector<8x1xi32> to vector<8x50xi32>
    %4 = arith.cmpi eq, %0, %3 : vector<8x50xi32>
    %5 = arith.extui %4 : vector<8x50xi1> to vector<8x50xi32>
    %6 = arith.sitofp %5 : vector<8x50xi32> to vector<8x50xf32>
    %c0_2 = arith.constant 0 : index
    %c0_3 = arith.constant 0 : index
    %7 = vector.load %arg2[%c0_2, %c0_3] : memref<50x32xf32, #tpu.memory_space<vmem>>, vector<50x32xf32>
    %cst = arith.constant dense<0.000000e+00> : vector<8x32xf32>
    %8 = tpu.matmul %6, %7, %cst {dimension_numbers = #tpu.dot_dimension_numbers<[1], [0], [0], [1], [0, 0, 1, 1], [], []>} : vector<8x50xf32>, vector<50x32xf32>, vector<8x32xf32> -> vector<8x32xf32>
    %c0_4 = arith.constant 0 : index
    %c0_5 = arith.constant 0 : index
    %9 = vector.load %arg3[%c0_4, %c0_5] : memref<8x32xf32, #tpu.memory_space<vmem>>, vector<8x32xf32>
    %10 = arith.addf %8, %9 : vector<8x32xf32>
    %c0_6 = arith.constant 0 : index
    %c0_7 = arith.constant 0 : index
    %c0_8 = arith.constant 0 : index
    %11 = vector.load %arg4[%c0_6, %c0_7, %c0_8] : memref<1x8x32xf32, #tpu.memory_space<vmem>>, vector<1x8x32xf32>
    %12 = vector.shape_cast %11 : vector<1x8x32xf32> to vector<8x32xf32>
    %13 = vector.shape_cast %10 : vector<8x32xf32> to vector<1x8x32xf32>
    tpu.vector_store %arg4[%c0_6, %c0_7, %c0_8], %13 {strides = array<i32>} : memref<1x8x32xf32, #tpu.memory_space<vmem>>, vector<1x8x32xf32>,
    return
  }
  func.func @transform_0(%arg0: i32) -> (i32, i32, i32) {
    %c0_i32 = arith.constant 0 : i32
    %c0_i32_0 = arith.constant 0 : i32
    %c0_i32_1 = arith.constant 0 : i32
    return %arg0, %c0_i32, %c0_i32_0 : i32, i32, i32
  }
  func.func @transform_1(%arg0: i32) -> (i32, i32) {
    %c0_i32 = arith.constant 0 : i32
    %c0_i32_0 = arith.constant 0 : i32
    %c0_i32_1 = arith.constant 0 : i32
    return %c0_i32, %c0_i32_0 : i32, i32
  }
  func.func @transform_2(%arg0: i32) -> (i32, i32) {
    %c0_i32 = arith.constant 0 : i32
    %c0_i32_0 = arith.constant 0 : i32
    %c0_i32_1 = arith.constant 0 : i32
    return %c0_i32, %c0_i32_0 : i32, i32
  }
  func.func @transform_3(%arg0: i32) -> (i32, i32, i32) {
    %c0_i32 = arith.constant 0 : i32
    %c0_i32_0 = arith.constant 0 : i32
    %c0_i32_1 = arith.constant 0 : i32
    return %arg0, %c0_i32, %c0_i32_0 : i32, i32, i32
  }
}

</mosaic_0001>

<llo_original>
// kernel: tpu_custom_call.1
$region0: #{tpu_custom_call.1}
  #allocation0 [shape = 'u32[]', space=smem, size = 0x4, offset = 0x4, fixed_abs, tag = 'smem constant byte address 0x4 - core index']
  #allocation1 [shape = 'u32[144,128]{1,0:T(1,128)}', space=vmem, size = 0x12000, scoped, tag = 'internal scratch']
  %s0 = inlined_call_operand.vmem [shape: s32[4,8,1], index: 0, kind: input, shape index: {}]
  %s1 = inlined_call_operand.vmem [shape: f32[50,32], index: 1, kind: input, shape index: {}]
  %s2 = inlined_call_operand.vmem [shape: f32[8,32], index: 2, kind: input, shape index: {}]
  %s3 = inlined_call_operand.hbm [shape: f32[4,8,32], index: 3, kind: output, shape index: {}]
  %s4 = sld [smem:[#allocation0]]
  $region45: #{tpu_custom_call.1} parent=0
    _
  %s6 = ssub.s32 1, %s4
  %s7 = scalar_select 0, %s6, %s4
  $region1: #{tpu_custom_call.1} parent=0
    #allocation2 [shape = 'u8[8192]{0}', space=vmem, size = 0x2000, scoped, tag = 'output window, operand 0']
    #allocation3 [shape = 's32[2]{0}', space=sflag, size = 0x8, scoped, tag = 'scoped memory for tpu_custom_call.1']
    %8 = vsyncpa [#allocation3], 0
    %s9 = scalar_lea.sflag [#allocation3], 1
    %10 = vsyncpa %s9, 0
    loop: start=0, step=1, limit=6
    $region2: #{tpu_custom_call.1} parent=1 // loop_pre_header
      _
    $region3: #{tpu_custom_call.1} parent=1 // loop_header
      %s12 = sphi 0, %s16
      %p13 = scmp.ge.s32.totalorder %s12, 6
      %s22 = sphi 0, %s24
      %s25 = sphi 0, %s22
      %s26 = sphi 0, %s25
      %s42 = sphi 0, %s26
      %s46 = sphi 0, %s46
      %s48 = sphi 0, %s46
      %s49 = sphi 0, %s48
      %s63 = sphi 0, %s49
      %s67 = sphi 0, %s67
      %s69 = sphi 0, %s67
      %s70 = sphi 0, %s69
      %s84 = sphi 0, %s70
      %s90 = sphi 0, %s92
      %s93 = sphi 0, %s90
      %s94 = sphi 0, %s93
      %s110 = sphi 0, %s94
    $region4: #{tpu_custom_call.1} parent=1 // loop_header_branch
      %15 = sbr.rel (%p13) target = $region8
    $region5: #{tpu_custom_call.1} parent=1 // loop_body
      %s17 = ssub.s32 %s12, 1
      %s18 = ssub.s32 %s12, 2
      %s19 = sadd.s32 %s12, 1
      %s20 = ssub.s32 %s12, %s19
      %p21 = scmp.eq.s32.totalorder %s20, 0
      %s23 = sadd.s32 %s22, 1
      %s24 = scalar_select %p21, %s22, %s23
      %p27 = pneg %p21
      %p28 = scmp.eq.s32.totalorder %s12, 3
      %p29 = por %p27, %p28
      %p30 = scmp.ne.s32.totalorder %s22, %s25
      %p31 = scmp.eq.s32.totalorder %s12, 0
      %p32 = por %p30, %p31
      %p33 = scmp.ne.s32.totalorder %s22, %s25
      %p34 = scmp.eq.s32.totalorder %s17, 3
      %p35 = por %p33, %p34
      %p36 = scmp.ne.s32.totalorder %s25, %s26
      %p37 = scmp.eq.s32.totalorder %s17, 0
      %p38 = por %p36, %p37
      %p39 = scmp.ne.s32.totalorder %s25, %s26
      %p40 = scmp.eq.s32.totalorder %s18, 3
      %p41 = por %p39, %p40
      %p43 = scmp.ne.s32.totalorder %s26, %s42
      %p44 = scmp.eq.s32.totalorder %s18, 0
      %p45 = por %p43, %p44
      %s47 = sadd.s32 %s46, 1
      %p50 = scmp.eq.s32.totalorder %s12, 3
      %p51 = scmp.ne.s32.totalorder %s46, %s48
      %p52 = scmp.eq.s32.totalorder %s12, 0
      %p53 = por %p51, %p52
      %p54 = scmp.ne.s32.totalorder %s46, %s48
      %p55 = scmp.eq.s32.totalorder %s17, 3
      %p56 = por %p54, %p55
      %p57 = scmp.ne.s32.totalorder %s48, %s49
      %p58 = scmp.eq.s32.totalorder %s17, 0
      %p59 = por %p57, %p58
      %p60 = scmp.ne.s32.totalorder %s48, %s49
      %p61 = scmp.eq.s32.totalorder %s18, 3
      %p62 = por %p60, %p61
      %p64 = scmp.ne.s32.totalorder %s49, %s63
      %p65 = scmp.eq.s32.totalorder %s18, 0
      %p66 = por %p64, %p65
      %s68 = sadd.s32 %s67, 1
      %p71 = scmp.eq.s32.totalorder %s12, 3
      %p72 = scmp.ne.s32.totalorder %s67, %s69
      %p73 = scmp.eq.s32.totalorder %s12, 0
      %p74 = por %p72, %p73
      %p75 = scmp.ne.s32.totalorder %s67, %s69
      %p76 = scmp.eq.s32.totalorder %s17, 3
      %p77 = por %p75, %p76
      %p78 = scmp.ne.s32.totalorder %s69, %s70
      %p79 = scmp.eq.s32.totalorder %s17, 0
      %p80 = por %p78, %p79
      %p81 = scmp.ne.s32.totalorder %s69, %s70
      %p82 = scmp.eq.s32.totalorder %s18, 3
      %p83 = por %p81, %p82
      %p85 = scmp.ne.s32.totalorder %s70, %s84
      %p86 = scmp.eq.s32.totalorder %s18, 0
      %p87 = por %p85, %p86
      %s88 = ssub.s32 %s12, %s19
      %p89 = scmp.eq.s32.totalorder %s88, 0
      %s91 = sadd.s32 %s90, 1
      %s92 = scalar_select %p89, %s90, %s91
      %p95 = pneg %p89
      %p96 = scmp.eq.s32.totalorder %s12, 3
      %p97 = por %p95, %p96
      %p98 = scmp.ne.s32.totalorder %s90, %s93
      %p99 = scmp.eq.s32.totalorder %s12, 0
      %p100 = por %p98, %p99
      %p101 = scmp.ne.s32.totalorder %s90, %s93
      %p102 = scmp.eq.s32.totalorder %s17, 3
      %p103 = por %p101, %p102
      %p104 = scmp.ne.s32.totalorder %s93, %s94
      %p105 = scmp.eq.s32.totalorder %s17, 0
      %p106 = por %p104, %p105
      %p107 = scmp.ne.s32.totalorder %s93, %s94
      %p108 = scmp.eq.s32.totalorder %s18, 3
      %p109 = por %p107, %p108
      %p111 = scmp.ne.s32.totalorder %s94, %s110
      %p112 = scmp.eq.s32.totalorder %s18, 0
      %p113 = por %p111, %p112
      %p114 = scmp.le.s32.totalorder 1, %s12
      %p115 = scmp.lt.s32.totalorder %s12, 5
      %p116 = pnand %p114, %p115
      %p117 = pneg %p116
      // Predicated region
      $region9: #{tpu_custom_call.1} parent=5 // pred_check
        _
      $region10: #{tpu_custom_call.1} parent=5 // pred_check_branch
        %119 = sbr.rel (%p116) target = $region12
      $region11: #{tpu_custom_call.1} parent=5 // pred_region
        %s120 = ssub.s32 %s12, 1
        // Predicated region
        $region13: #{tpu_custom_call.1} parent=11 // pred_check
          %p121 = pneg %p59
        $region14: #{tpu_custom_call.1} parent=11 // pred_check_branch
          %123 = sbr.rel (%p121) target = $region16
        $region15: #{tpu_custom_call.1} parent=11 // pred_region
          _
        $region16: #{tpu_custom_call.1} parent=11 // pred_fallthru
          _
        // Predicated region
        $region17: #{tpu_custom_call.1} parent=11 // pred_check
          %p124 = pneg %p80
        $region18: #{tpu_custom_call.1} parent=11 // pred_check_branch
          %126 = sbr.rel (%p124) target = $region20
        $region19: #{tpu_custom_call.1} parent=11 // pred_region
          _
        $region20: #{tpu_custom_call.1} parent=11 // pred_fallthru
          _
      $region12: #{tpu_custom_call.1} parent=5 // pred_fallthru
        _
      %p127 = scmp.lt.s32.totalorder %s12, 4
      // Predicated region
      $region21: #{tpu_custom_call.1} parent=5 // pred_check
        %p128 = pneg %p127
      $region22: #{tpu_custom_call.1} parent=5 // pred_check_branch
        %130 = sbr.rel (%p128) target = $region24
      $region23: #{tpu_custom_call.1} parent=5 // pred_region
        // Predicated region
        $region25: #{tpu_custom_call.1} parent=23 // pred_check
          %p131 = pneg %p32
        $region26: #{tpu_custom_call.1} parent=23 // pred_check_branch
          %133 = sbr.rel (%p131) target = $region28
        $region27: #{tpu_custom_call.1} parent=23 // pred_region
          %p134 = scmp.lt.s32.totalorder %s12, 3
          %s135 = scalar_select %p134, %s12, 3
          %s136 = smul.addr %s135, 8
          %s137 = scalar_lea.vmem %s0, %s136
        $region28: #{tpu_custom_call.1} parent=23 // pred_fallthru
          _
      $region24: #{tpu_custom_call.1} parent=5 // pred_fallthru
        _
      %p138 = scmp.le.s32.totalorder 1, %s12
      %p139 = scmp.lt.s32.totalorder %s12, 5
      %p140 = pnand %p138, %p139
      %p141 = pneg %p140
      // Predicated region
      $region29: #{tpu_custom_call.1} parent=5 // pred_check
        _
      $region30: #{tpu_custom_call.1} parent=5 // pred_check_branch
        %143 = sbr.rel (%p140) target = $region32
      $region31: #{tpu_custom_call.1} parent=5 // pred_region
        %s144 = ssub.s32 %s12, 1
        %p145 = scmp.lt.s32.totalorder %s17, 3
        %s146 = scalar_select %p145, %s17, 3
        %s147 = smul.addr %s146, 8
        %s148 = scalar_lea.vmem %s0, %s147
        %p149 = pneg %p38
        %p150 = pneg %p35
        %p151 = pneg %p59
        %p152 = pneg %p56
        %p153 = pneg %p80
        %p154 = pneg %p77
        %p155 = pneg %p106
        %p156 = pneg %p103
        %s157 = sand.u32 %s93, 1
        %s158 = scalar_lea.sflag [#allocation3], %s157
        %s159 = sand.u32 %s93, 1
        %s160 = smul.addr %s159, 8
        %s161 = scalar_lea.vmem [#allocation2], %s160
        %p162 = scmp.lt.s32.totalorder %s17, 3
        %s163 = scalar_select %p162, %s17, 3
        %s164 = smul.addr %s163, 8
        %s165 = scalar_lea.vmem %s0, %s164
        %v166 = vlaneseq
        %v167 = vand.u32 %v166, 127
        %v168 = vld [vmem:[%s165] sm:$0xff]
        %169 = vset.pattern.permute.xlu0 0
        %170 = vperm.xlu0 %169, %v168
        %v171 = vpop.permute.xlu0 %170
        %vm172 = vcmp.eq.s32.totalorder %v167, %v171
        %v173 = vsel %vm172, 1, 0
        %v174 = vcvt.s32.f32 %v173
        %v175 = vld [vmem:[%s1] sm:$0xff]
        %v176 = vld [vmem:[%s1 + $0x8] sm:$0xff]
        %v177 = vld [vmem:[%s1 + $0x10] sm:$0xff]
        %v178 = vld [vmem:[%s1 + $0x18] sm:$0xff]
        %v179 = vld [vmem:[%s1 + $0x20] sm:$0xff]
        %v180 = vld [vmem:[%s1 + $0x28] sm:$0xff]
        %v181 = vld [vmem:[%s1 + $0x30] sm:$0x3]
        %v182 = vld [vmem:[%s2] sm:$0xff]
        %vm183 = vcmask 408576
        %v185 = vsel %vm183, %v174, 0
        %vm187 = vcmask 1041408
        %v189 = vsel %vm187, %v181, 0
        %191 = vmatprep.subr.mxu0 0.0
        %192 = vmatpush1.msra.mxu0 0.0
        %193 = vmatprep.subr.mxu0 0.0
        %194 = vmatpush1.msra.mxu0 0.0
        %195 = vmatprep.subr.mxu0 0.0
        %196 = vmatpush1.msra.mxu0 0.0
        %197 = vmatprep.subr.mxu0 0.0
        %198 = vmatpush1.msra.mxu0 0.0
        %199 = vmatprep.subr.mxu0 0.0
        %200 = vmatpush1.msra.mxu0 0.0
        %201 = vmatprep.subr.mxu0 0.0
        %202 = vmatpush1.msra.mxu0 0.0
        %203 = vmatprep.subr.mxu0 0.0
        %204 = vmatpush1.msra.mxu0 0.0
        %205 = vmatprep.subr.mxu0 0.0
        %206 = vmatpush1.msra.mxu0 0.0
        %207 = vmatprep.subr.mxu0 0.0
        %208 = vmatpush1.msra.mxu0 0.0
        %209 = vmatprep.subr.mxu0 0.0
        %210 = vmatpush1.msra.mxu0 %v189
        %211 = vmatprep.subr.mxu0 0.0
        %212 = vmatpush1.msra.mxu0 %v180
        %213 = vmatprep.subr.mxu0 0.0
        %214 = vmatpush1.msra.mxu0 %v179
        %215 = vmatprep.subr.mxu0 0.0
        %216 = vmatpush1.msra.mxu0 %v178
        %217 = vmatprep.subr.mxu0 0.0
        %218 = vmatpush1.msra.mxu0 %v177
        %219 = vmatprep.subr.mxu0 0.0
        %220 = vmatpush1.msra.mxu0 %v176
        %221 = vmatprep.subr.mxu0 0.0
        %222 = vmatpush1.msra.mxu0 %v175
        %223 = vmatprep.subr.mxu0 0.0
        %224 = vmatpush2.msra.mxu0 0.0
        %225 = vmatprep.subr.mxu0 0.0
        %226 = vmatpush2.msra.mxu0 0.0
        %227 = vmatprep.subr.mxu0 0.0
        %228 = vmatpush2.msra.mxu0 0.0
        %229 = vmatprep.subr.mxu0 0.0
        %230 = vmatpush2.msra.mxu0 0.0
        %231 = vmatprep.subr.mxu0 0.0
        %232 = vmatpush2.msra.mxu0 0.0
        %233 = vmatprep.subr.mxu0 0.0
        %234 = vmatpush2.msra.mxu0 0.0
        %235 = vmatprep.subr.mxu0 0.0
        %236 = vmatpush2.msra.mxu0 0.0
        %237 = vmatprep.subr.mxu0 0.0
        %238 = vmatpush2.msra.mxu0 0.0
        %239 = vmatprep.subr.mxu0 0.0
        %240 = vmatpush2.msra.mxu0 0.0
        %241 = vmatprep.subr.mxu0 0.0
        %242 = vmatpush2.msra.mxu0 0.0
        %243 = vmatprep.subr.mxu0 0.0
        %244 = vmatpush2.msra.mxu0 0.0
        %245 = vmatprep.subr.mxu0 0.0
        %246 = vmatpush2.msra.mxu0 0.0
        %247 = vmatprep.subr.mxu0 0.0
        %248 = vmatpush2.msra.mxu0 0.0
        %249 = vmatprep.subr.mxu0 0.0
        %250 = vmatpush2.msra.mxu0 0.0
        %251 = vmatprep.subr.mxu0 0.0
        %252 = vmatpush2.msra.mxu0 0.0
        %253 = vmatprep.subr.mxu0 0.0
        %254 = vmatpush2.msra.mxu0 0.0
        %255 = vmatprep.mubr.f32.mxu0 0.0
        %256 = vmatmul.mubr.f32.gmra.mxu0 %v185
        %v257 = vpop.f32.mrf.mxu0
        %v258 = vadd.f32 %v182, %v257
        %v259 = vpop.f32.mrf.mxu0
        %260 = vdwg.mxu0
        %vm261 = vcmask 261120
        %262 = vst.msk [vmem:[%s161] sm:$0xff] %vm261, %v258
        %s263 = sand.u32 %s93, 1
        %s264 = scalar_lea.sflag [#allocation3], %s263
        %s265 = sand.u32 %s93, 1
        %s266 = smul.addr %s265, 8
        %s267 = scalar_lea.vmem [#allocation2], %s266
        // Predicated region
        $region33: #{tpu_custom_call.1} parent=31 // pred_check
          %p268 = pneg %p103
        $region34: #{tpu_custom_call.1} parent=31 // pred_check_branch
          %270 = sbr.rel (%p268) target = $region36
        $region35: #{tpu_custom_call.1} parent=31 // pred_region
          %s272 = ssub.s32 128, 128
          %273 = vsyncadd %s264, %s272
          %s274 = smul.addr %s17, 128
          %s275 = scalar_lea.hbm %s3, %s274
          %s277 = sshll.u32 %s267, 4
          %s278 = int_to_ptr.vmem [resolvable:$true] %s277
          %280 = dma.vmem_to_hbm [thread:$0]  %s278, 128, %s275, %s264
        $region36: #{tpu_custom_call.1} parent=31 // pred_fallthru
          _
      $region32: #{tpu_custom_call.1} parent=5 // pred_fallthru
        _
      %p281 = scmp.le.s32.totalorder 2, %s12
      // Predicated region
      $region37: #{tpu_custom_call.1} parent=5 // pred_check
        %p282 = pneg %p281
      $region38: #{tpu_custom_call.1} parent=5 // pred_check_branch
        %284 = sbr.rel (%p282) target = $region40
      $region39: #{tpu_custom_call.1} parent=5 // pred_region
        %s285 = ssub.s32 %s12, 2
        // Predicated region
        $region41: #{tpu_custom_call.1} parent=39 // pred_check
          %p286 = pneg %p109
        $region42: #{tpu_custom_call.1} parent=39 // pred_check_branch
          %288 = sbr.rel (%p286) target = $region44
        $region43: #{tpu_custom_call.1} parent=39 // pred_region
          %s289 = sand.u32 %s94, 1
          %s290 = scalar_lea.sflag [#allocation3], %s289
          %s291 = sand.u32 %s94, 1
          %s292 = smul.addr %s291, 8
          %s293 = scalar_lea.vmem [#allocation2], %s292
          %294 = dma.done %s290, 128
        $region44: #{tpu_custom_call.1} parent=39 // pred_fallthru
          _
      $region40: #{tpu_custom_call.1} parent=5 // pred_fallthru
        _
    $region6: #{tpu_custom_call.1} parent=1 // loop_footer
      %s16 = sadd.s32 1, %s12
    $region7: #{tpu_custom_call.1} parent=1 // loop_footer_branch
      %11 = sbr.rel target = $region3
    $region8: #{tpu_custom_call.1} parent=1 // loop_exit
      _
    %295 = vsyncpa [#allocation3], 1
    %s296 = scalar_lea.sflag [#allocation3], 1
    %297 = vsyncpa %s296, 1

</llo_original>
